<compile_context>
chip_gen: v6e
topology: v6e:2x2x1
jax: 0.10.0
libtpu: 0.0.40
codegen_flags: <defaults>
</compile_context>

<pallas_src>
import numpy as np
import jax
import jax.numpy as jnp
from jax.experimental import pallas as pl
from jax.experimental.pallas import tpu as pltpu


def esn_forward_kernel(x_ref, win_ref, w_ref, wout_ref, b_ref, wfb_ref, bin_ref,
                       out_ref, h_sc, u_sc):
    """Sequential ESN recurrence, entirely inside one kernel invocation.

    x_ref    : (seq_len, input_size)   f32  VMEM
    win_ref  : (input_size, R_pad)     f32  VMEM  (Win^T, zero-padded reservoir axis)
    w_ref    : (R_pad, R_pad)          bf16 VMEM  (W^T, zero-padded, hot-path operand)
    wout_ref : (R_pad, O_pad)          f32  VMEM  (Wout.weight^T, zero-padded)
    b_ref    : (1, O_pad)              f32  VMEM  (Wout.bias, zero-padded)
    wfb_ref  : (R_pad, R_pad)          f32  VMEM  (Wout^T @ Win^T, fused feedback)
    bin_ref  : (1, R_pad)              f32  VMEM  (bias @ Win^T)
    out_ref  : (pred_len, O_pad)       f32  VMEM  (lane-dense output slab)
    h_sc     : (pred_pad, R_pad)       f32  VMEM scratch (hidden-state rows)
    u_sc     : (pred_pad, R_pad)       f32  VMEM scratch (per-step input projections)
    """
    seq_len = x_ref.shape[0]
    pred_len = out_ref.shape[0]
    r_pad = w_ref.shape[0]
    n_teacher = min(seq_len, pred_len)

    # ---- Off-chain prework --------------------------------------------------
    # Teacher-forced input projections: one (n_teacher, in) @ (in, R_pad) matmul,
    # results parked in VMEM scratch instead of being carried as live vregs.
    u_sc[pl.ds(0, n_teacher), :] = jnp.dot(
        x_ref[pl.ds(0, n_teacher), :], win_ref[...],
        preferred_element_type=jnp.float32)

    # Hot-path recurrent weight, hoisted once (bf16: native MXU operand dtype on
    # v5e/v6e/v7x) -> only ~8 vregs stay resident across the recurrence.
    w_bf = w_ref[...]

    # ---- Serial recurrence --------------------------------------------------
    # State is a single (1, R_pad) f32 value; each h row is also written to the
    # scratch slab (store is off the dependent chain), nothing else stays live.
    # TODO(synk): for large pred_len switch the unrolled Python loops to
    # lax.fori_loop(unroll=True) indexing the same scratch ring with pl.ds.
    def step(t, h, first):
        u_t = u_sc[pl.ds(t, 1), :]
        if first:
            pre = u_t                                  # h == 0  =>  h @ W^T == 0
        else:
            pre = u_t + jnp.dot(h.astype(jnp.bfloat16), w_bf,
                                preferred_element_type=jnp.float32)
        h = jnp.tanh(pre)
        h_sc[pl.ds(t, 1), :] = h
        return h

    h = jnp.zeros((1, r_pad), jnp.float32)
    for t in range(n_teacher):                         # teacher-forced phase
        h = step(t, h, first=(t == 0))

    # Autoregressive phase, chunked by seq_len.  Every h_prev a chunk needs
    # (h_{c0-seq_len} .. h_{c0-seq_len+clen-1}) is already in h_sc before the
    # chunk starts, so the feedback projection
    #     input_t @ Win^T == h_{t-seq_len} @ (Wout^T @ Win^T) + b @ Win^T
    # hoists out of the serial chain as ONE batched matmul per chunk, and each
    # AR step is just tanh(u_t + h @ W^T), identical to a teacher-forced step.
    for c0 in range(seq_len, pred_len, seq_len):
        clen = min(seq_len, pred_len - c0)
        h_prev = h_sc[pl.ds(c0 - seq_len, clen), :]
        u_sc[pl.ds(c0, clen), :] = (
            jnp.dot(h_prev, wfb_ref[...], preferred_element_type=jnp.float32)
            + bin_ref[...])
        for t in range(c0, c0 + clen):
            h = step(t, h, first=False)

    # ---- Readout (off the serial chain) -------------------------------------
    # wout / b are only loaded here, so they are never live across the loop.
    # Output slab is 128-lane dense -> unmasked vst; wrapper slices real lanes.
    h_all = h_sc[pl.ds(0, pred_len), :]
    out_ref[...] = (jnp.dot(h_all, wout_ref[...], preferred_element_type=jnp.float32)
                    + b_ref[...]).astype(out_ref.dtype)


def esn_reservoir_forward(x, Win, W, Wout_w, Wout_b, pred_len):
    """x: (1, seq_len, input_size). Returns (1, pred_len, output_size)."""
    assert x.shape[0] == 1, "reference module hard-codes batch 1 (it indexes x[0, t, :])"
    _, seq_len, input_size = x.shape
    reservoir_size = W.shape[0]
    output_size = Wout_w.shape[0]
    if pred_len > seq_len:
        assert output_size == input_size, (
            "autoregressive feedback (torch.cat along time) requires output_size == input_size")

    f32 = jnp.float32
    hp = jax.lax.Precision.HIGHEST
    r_pad = ((reservoir_size + 127) // 128) * 128       # lane-dense reservoir axis
    o_pad = ((output_size + 127) // 128) * 128          # lane-dense output axis
    p_pad = ((pred_len + 7) // 8) * 8                   # sublane-friendly scratch rows

    x2d = x[0].astype(f32)                                                     # (seq, in)
    win_t = jnp.zeros((input_size, r_pad), f32).at[:, :reservoir_size].set(Win.T.astype(f32))
    w_t = jnp.zeros((r_pad, r_pad), f32).at[:reservoir_size, :reservoir_size].set(W.T.astype(f32))
    w_t_bf = w_t.astype(jnp.bfloat16)                   # hot-path MXU operand
    wout_t = jnp.zeros((r_pad, o_pad), f32).at[:reservoir_size, :output_size].set(
        Wout_w.T.astype(f32))
    b2d = jnp.zeros((1, o_pad), f32).at[0, :output_size].set(Wout_b.astype(f32))

    # Fused autoregressive-feedback projection (padded lanes stay exactly zero).
    if output_size == input_size:
        wfb_core = jnp.dot(Wout_w.T.astype(f32), Win.T.astype(f32), precision=hp)
        wfb = jnp.zeros((r_pad, r_pad), f32).at[:reservoir_size, :reservoir_size].set(wfb_core)
        bin_core = jnp.dot(Wout_b.astype(f32)[None, :], Win.T.astype(f32), precision=hp)
        b_in = jnp.zeros((1, r_pad), f32).at[:, :reservoir_size].set(bin_core)
    else:  # feedback branch never taken (pred_len <= seq_len); pass dummies
        wfb = jnp.zeros((r_pad, r_pad), f32)
        b_in = jnp.zeros((1, r_pad), f32)

    out_pad = pl.pallas_call(
        esn_forward_kernel,
        out_shape=jax.ShapeDtypeStruct((pred_len, o_pad), f32),
        in_specs=[pl.BlockSpec(memory_space=pltpu.MemorySpace.VMEM)] * 7,
        out_specs=pl.BlockSpec(memory_space=pltpu.MemorySpace.VMEM),
        scratch_shapes=[pltpu.VMEM((p_pad, r_pad), f32),    # h rows
                        pltpu.VMEM((p_pad, r_pad), f32)],   # per-step input projections
    )(x2d, win_t, w_t_bf, wout_t, b2d, wfb, b_in)

    return out_pad[:, :output_size][None]                 # (1, pred_len, output_size)


def esn_reference(x, Win, W, Wout_w, Wout_b, pred_len):
    """Pure-JAX f32 transcription of the PyTorch forward (for correctness check)."""
    hp = jax.lax.Precision.HIGHEST
    h = jnp.zeros((1, W.shape[0]), jnp.float32)
    xs = x
    for t in range(pred_len):
        inp = xs[0, t, :][None, :]
        h = jnp.tanh(jnp.dot(inp, Win.T, precision=hp) + jnp.dot(h, W.T, precision=hp))
        out = jnp.dot(h, Wout_w.T, precision=hp) + Wout_b[None, :]
        xs = jnp.concatenate([xs, out[:, None, :]], axis=1)
    return xs[:, -pred_len:, :]


def init_params(key, input_size, reservoir_size, output_size,
                spectral_radius=0.9, sparsity=0.1):
    """Deterministic parameter init matching the module's __init__ semantics."""
    k1, k2, k3, k4, k5 = jax.random.split(key, 5)
    Win = jax.random.normal(k1, (reservoir_size, input_size), jnp.float32)
    W = jax.random.normal(k2, (reservoir_size, reservoir_size), jnp.float32)
    # spectral-radius rescale: non-symmetric eigvals have no TPU path, so this
    # init-time-only step is done with numpy on host (setup glue, not forward compute).
    eig = np.linalg.eigvals(np.asarray(W))
    W = W * np.float32(spectral_radius / np.max(np.abs(eig)))
    mask = (jax.random.uniform(k3, (reservoir_size, reservoir_size)) < sparsity).astype(jnp.float32)
    W = W * mask
    # nn.Linear default init: U(-1/sqrt(fan_in), 1/sqrt(fan_in))
    bound = 1.0 / np.sqrt(reservoir_size)
    Wout_w = jax.random.uniform(k4, (output_size, reservoir_size), jnp.float32, -bound, bound)
    Wout_b = jax.random.uniform(k5, (output_size,), jnp.float32, -bound, bound)
    return Win, W, Wout_w, Wout_b


if __name__ == "__main__":
    input_size = 4
    reservoir_size = 32
    output_size = 4      # must equal input_size for the torch.cat feedback path
    seq_len = 8
    pred_len = 12        # > seq_len so the autoregressive-feedback branch is exercised

    key = jax.random.PRNGKey(0)
    kx, kp = jax.random.split(key)
    x = jax.random.normal(kx, (1, seq_len, input_size), jnp.float32)
    Win, W, Wout_w, Wout_b = init_params(kp, input_size, reservoir_size, output_size)

    out = esn_reservoir_forward(x, Win, W, Wout_w, Wout_b, pred_len)
    out = jax.block_until_ready(out)

    ref = esn_reference(x, Win, W, Wout_w, Wout_b, pred_len)
    assert out.shape == (1, pred_len, output_size), out.shape
    # bf16 operands on the hot-path recurrent dot (per perf review); tanh-bounded
    # state keeps the accumulated error comfortably inside this tolerance.
    max_err = float(jnp.max(jnp.abs(out - ref)))
    assert jnp.allclose(out, ref, atol=2e-2, rtol=2e-2), f"max_err={max_err}"
    print("KERNEL_OK")
</pallas_src>

<mosaic_0001>
module attributes {stable_mosaic.version = 11 : i64} {
  func.func @esn_forward_kernel(%arg0: memref<8x4xf32, #tpu.memory_space<vmem>>, %arg1: memref<4x128xf32, #tpu.memory_space<vmem>>, %arg2: memref<128x128xbf16, #tpu.memory_space<vmem>>, %arg3: memref<128x128xf32, #tpu.memory_space<vmem>>, %arg4: memref<1x128xf32, #tpu.memory_space<vmem>>, %arg5: memref<128x128xf32, #tpu.memory_space<vmem>>, %arg6: memref<1x128xf32, #tpu.memory_space<vmem>>, %arg7: memref<12x128xf32, #tpu.memory_space<vmem>>, %arg8: memref<16x128xf32, #tpu.memory_space<vmem>>, %arg9: memref<16x128xf32, #tpu.memory_space<vmem>>) attributes {dimension_semantics = [], scalar_prefetch = 0 : i64, scratch_operands = 2 : i64, tpu.core_type = #tpu.core_type<tc>} {
    %c0 = arith.constant 0 : index
    %c0_0 = arith.constant 0 : index
    %0 = vector.load %arg0[%c0, %c0_0] : memref<8x4xf32, #tpu.memory_space<vmem>>, vector<8x4xf32>
    %c0_1 = arith.constant 0 : index
    %c0_2 = arith.constant 0 : index
    %1 = vector.load %arg1[%c0_1, %c0_2] : memref<4x128xf32, #tpu.memory_space<vmem>>, vector<4x128xf32>
    %cst = arith.constant dense<0.000000e+00> : vector<8x128xf32>
    %2 = tpu.matmul %0, %1, %cst {dimension_numbers = #tpu.dot_dimension_numbers<[1], [0], [0], [1], [0, 0, 1, 1], [], []>} : vector<8x4xf32>, vector<4x128xf32>, vector<8x128xf32> -> vector<8x128xf32>
    %c0_3 = arith.constant 0 : index
    %c0_4 = arith.constant 0 : index
    %3 = vector.load %arg9[%c0_3, %c0_4] : memref<16x128xf32, #tpu.memory_space<vmem>>, vector<8x128xf32>
    tpu.vector_store %arg9[%c0_3, %c0_4], %2 {strides = array<i32>} : memref<16x128xf32, #tpu.memory_space<vmem>>, vector<8x128xf32>,
    %c0_5 = arith.constant 0 : index
    %c0_6 = arith.constant 0 : index
    %4 = vector.load %arg2[%c0_5, %c0_6] : memref<128x128xbf16, #tpu.memory_space<vmem>>, vector<128x128xbf16>
    %c0_7 = arith.constant 0 : index
    %c0_8 = arith.constant 0 : index
    %5 = vector.load %arg9[%c0_7, %c0_8] : memref<16x128xf32, #tpu.memory_space<vmem>>, vector<1x128xf32>
    %6 = math.tanh %5 : vector<1x128xf32>
    %c0_9 = arith.constant 0 : index
    %c0_10 = arith.constant 0 : index
    %7 = vector.load %arg8[%c0_9, %c0_10] : memref<16x128xf32, #tpu.memory_space<vmem>>, vector<1x128xf32>
    tpu.vector_store %arg8[%c0_9, %c0_10], %6 {strides = array<i32>} : memref<16x128xf32, #tpu.memory_space<vmem>>, vector<1x128xf32>,
    %c1 = arith.constant 1 : index
    %c0_11 = arith.constant 0 : index
    %8 = vector.load %arg9[%c1, %c0_11] : memref<16x128xf32, #tpu.memory_space<vmem>>, vector<1x128xf32>
    %9 = arith.truncf %6 : vector<1x128xf32> to vector<1x128xbf16>
    %cst_12 = arith.constant dense<0.000000e+00> : vector<1x128xf32>
    %10 = tpu.matmul %9, %4, %cst_12 {dimension_numbers = #tpu.dot_dimension_numbers<[1], [0], [0], [1], [0, 0, 1, 1], [], []>} : vector<1x128xbf16>, vector<128x128xbf16>, vector<1x128xf32> -> vector<1x128xf32>
    %11 = arith.addf %8, %10 : vector<1x128xf32>
    %12 = math.tanh %11 : vector<1x128xf32>
    %c1_13 = arith.constant 1 : index
    %c0_14 = arith.constant 0 : index
    %13 = vector.load %arg8[%c1_13, %c0_14] : memref<16x128xf32, #tpu.memory_space<vmem>>, vector<1x128xf32>
    tpu.vector_store %arg8[%c1_13, %c0_14], %12 {strides = array<i32>} : memref<16x128xf32, #tpu.memory_space<vmem>>, vector<1x128xf32>,
    %c2 = arith.constant 2 : index
    %c0_15 = arith.constant 0 : index
    %14 = vector.load %arg9[%c2, %c0_15] : memref<16x128xf32, #tpu.memory_space<vmem>>, vector<1x128xf32>
    %15 = arith.truncf %12 : vector<1x128xf32> to vector<1x128xbf16>
    %cst_16 = arith.constant dense<0.000000e+00> : vector<1x128xf32>
    %16 = tpu.matmul %15, %4, %cst_16 {dimension_numbers = #tpu.dot_dimension_numbers<[1], [0], [0], [1], [0, 0, 1, 1], [], []>} : vector<1x128xbf16>, vector<128x128xbf16>, vector<1x128xf32> -> vector<1x128xf32>
    %17 = arith.addf %14, %16 : vector<1x128xf32>
    %18 = math.tanh %17 : vector<1x128xf32>
    %c2_17 = arith.constant 2 : index
    %c0_18 = arith.constant 0 : index
    %19 = vector.load %arg8[%c2_17, %c0_18] : memref<16x128xf32, #tpu.memory_space<vmem>>, vector<1x128xf32>
    tpu.vector_store %arg8[%c2_17, %c0_18], %18 {strides = array<i32>} : memref<16x128xf32, #tpu.memory_space<vmem>>, vector<1x128xf32>,
    %c3 = arith.constant 3 : index
    %c0_19 = arith.constant 0 : index
    %20 = vector.load %arg9[%c3, %c0_19] : memref<16x128xf32, #tpu.memory_space<vmem>>, vector<1x128xf32>
    %21 = arith.truncf %18 : vector<1x128xf32> to vector<1x128xbf16>
    %cst_20 = arith.constant dense<0.000000e+00> : vector<1x128xf32>
    %22 = tpu.matmul %21, %4, %cst_20 {dimension_numbers = #tpu.dot_dimension_numbers<[1], [0], [0], [1], [0, 0, 1, 1], [], []>} : vector<1x128xbf16>, vector<128x128xbf16>, vector<1x128xf32> -> vector<1x128xf32>
    %23 = arith.addf %20, %22 : vector<1x128xf32>
    %24 = math.tanh %23 : vector<1x128xf32>
    %c3_21 = arith.constant 3 : index
    %c0_22 = arith.constant 0 : index
    %25 = vector.load %arg8[%c3_21, %c0_22] : memref<16x128xf32, #tpu.memory_space<vmem>>, vector<1x128xf32>
    tpu.vector_store %arg8[%c3_21, %c0_22], %24 {strides = array<i32>} : memref<16x128xf32, #tpu.memory_space<vmem>>, vector<1x128xf32>,
    %c4 = arith.constant 4 : index
    %c0_23 = arith.constant 0 : index
    %26 = vector.load %arg9[%c4, %c0_23] : memref<16x128xf32, #tpu.memory_space<vmem>>, vector<1x128xf32>
    %27 = arith.truncf %24 : vector<1x128xf32> to vector<1x128xbf16>
    %cst_24 = arith.constant dense<0.000000e+00> : vector<1x128xf32>
    %28 = tpu.matmul %27, %4, %cst_24 {dimension_numbers = #tpu.dot_dimension_numbers<[1], [0], [0], [1], [0, 0, 1, 1], [], []>} : vector<1x128xbf16>, vector<128x128xbf16>, vector<1x128xf32> -> vector<1x128xf32>
    %29 = arith.addf %26, %28 : vector<1x128xf32>
    %30 = math.tanh %29 : vector<1x128xf32>
    %c4_25 = arith.constant 4 : index
    %c0_26 = arith.constant 0 : index
    %31 = vector.load %arg8[%c4_25, %c0_26] : memref<16x128xf32, #tpu.memory_space<vmem>>, vector<1x128xf32>
    tpu.vector_store %arg8[%c4_25, %c0_26], %30 {strides = array<i32>} : memref<16x128xf32, #tpu.memory_space<vmem>>, vector<1x128xf32>,
    %c5 = arith.constant 5 : index
    %c0_27 = arith.constant 0 : index
    %32 = vector.load %arg9[%c5, %c0_27] : memref<16x128xf32, #tpu.memory_space<vmem>>, vector<1x128xf32>
    %33 = arith.truncf %30 : vector<1x128xf32> to vector<1x128xbf16>
    %cst_28 = arith.constant dense<0.000000e+00> : vector<1x128xf32>
    %34 = tpu.matmul %33, %4, %cst_28 {dimension_numbers = #tpu.dot_dimension_numbers<[1], [0], [0], [1], [0, 0, 1, 1], [], []>} : vector<1x128xbf16>, vector<128x128xbf16>, vector<1x128xf32> -> vector<1x128xf32>
    %35 = arith.addf %32, %34 : vector<1x128xf32>
    %36 = math.tanh %35 : vector<1x128xf32>
    %c5_29 = arith.constant 5 : index
    %c0_30 = arith.constant 0 : index
    %37 = vector.load %arg8[%c5_29, %c0_30] : memref<16x128xf32, #tpu.memory_space<vmem>>, vector<1x128xf32>
    tpu.vector_store %arg8[%c5_29, %c0_30], %36 {strides = array<i32>} : memref<16x128xf32, #tpu.memory_space<vmem>>, vector<1x128xf32>,
    %c6 = arith.constant 6 : index
    %c0_31 = arith.constant 0 : index
    %38 = vector.load %arg9[%c6, %c0_31] : memref<16x128xf32, #tpu.memory_space<vmem>>, vector<1x128xf32>
    %39 = arith.truncf %36 : vector<1x128xf32> to vector<1x128xbf16>
    %cst_32 = arith.constant dense<0.000000e+00> : vector<1x128xf32>
    %40 = tpu.matmul %39, %4, %cst_32 {dimension_numbers = #tpu.dot_dimension_numbers<[1], [0], [0], [1], [0, 0, 1, 1], [], []>} : vector<1x128xbf16>, vector<128x128xbf16>, vector<1x128xf32> -> vector<1x128xf32>
    %41 = arith.addf %38, %40 : vector<1x128xf32>
    %42 = math.tanh %41 : vector<1x128xf32>
    %c6_33 = arith.constant 6 : index
    %c0_34 = arith.constant 0 : index
    %43 = vector.load %arg8[%c6_33, %c0_34] : memref<16x128xf32, #tpu.memory_space<vmem>>, vector<1x128xf32>
    tpu.vector_store %arg8[%c6_33, %c0_34], %42 {strides = array<i32>} : memref<16x128xf32, #tpu.memory_space<vmem>>, vector<1x128xf32>,
    %c7 = arith.constant 7 : index
    %c0_35 = arith.constant 0 : index
    %44 = vector.load %arg9[%c7, %c0_35] : memref<16x128xf32, #tpu.memory_space<vmem>>, vector<1x128xf32>
    %45 = arith.truncf %42 : vector<1x128xf32> to vector<1x128xbf16>
    %cst_36 = arith.constant dense<0.000000e+00> : vector<1x128xf32>
    %46 = tpu.matmul %45, %4, %cst_36 {dimension_numbers = #tpu.dot_dimension_numbers<[1], [0], [0], [1], [0, 0, 1, 1], [], []>} : vector<1x128xbf16>, vector<128x128xbf16>, vector<1x128xf32> -> vector<1x128xf32>
    %47 = arith.addf %44, %46 : vector<1x128xf32>
    %48 = math.tanh %47 : vector<1x128xf32>
    %c7_37 = arith.constant 7 : index
    %c0_38 = arith.constant 0 : index
    %49 = vector.load %arg8[%c7_37, %c0_38] : memref<16x128xf32, #tpu.memory_space<vmem>>, vector<1x128xf32>
    tpu.vector_store %arg8[%c7_37, %c0_38], %48 {strides = array<i32>} : memref<16x128xf32, #tpu.memory_space<vmem>>, vector<1x128xf32>,
    %c0_39 = arith.constant 0 : index
    %c0_40 = arith.constant 0 : index
    %50 = vector.load %arg8[%c0_39, %c0_40] : memref<16x128xf32, #tpu.memory_space<vmem>>, vector<4x128xf32>
    %c0_41 = arith.constant 0 : index
    %c0_42 = arith.constant 0 : index
    %51 = vector.load %arg5[%c0_41, %c0_42] : memref<128x128xf32, #tpu.memory_space<vmem>>, vector<128x128xf32>
    %cst_43 = arith.constant dense<0.000000e+00> : vector<4x128xf32>
    %52 = tpu.matmul %50, %51, %cst_43 {dimension_numbers = #tpu.dot_dimension_numbers<[1], [0], [0], [1], [0, 0, 1, 1], [], []>} : vector<4x128xf32>, vector<128x128xf32>, vector<4x128xf32> -> vector<4x128xf32>
    %c0_44 = arith.constant 0 : index
    %c0_45 = arith.constant 0 : index
    %53 = vector.load %arg6[%c0_44, %c0_45] : memref<1x128xf32, #tpu.memory_space<vmem>>, vector<1x128xf32>
    %54 = vector.broadcast %53 : vector<1x128xf32> to vector<4x128xf32>
    %55 = arith.addf %52, %54 : vector<4x128xf32>
    %c8 = arith.constant 8 : index
    %c0_46 = arith.constant 0 : index
    %56 = vector.load %arg9[%c8, %c0_46] : memref<16x128xf32, #tpu.memory_space<vmem>>, vector<4x128xf32>
    tpu.vector_store %arg9[%c8, %c0_46], %55 {strides = array<i32>} : memref<16x128xf32, #tpu.memory_space<vmem>>, vector<4x128xf32>,
    %c8_47 = arith.constant 8 : index
    %c0_48 = arith.constant 0 : index
    %57 = vector.load %arg9[%c8_47, %c0_48] : memref<16x128xf32, #tpu.memory_space<vmem>>, vector<1x128xf32>
    %58 = arith.truncf %48 : vector<1x128xf32> to vector<1x128xbf16>
    %cst_49 = arith.constant dense<0.000000e+00> : vector<1x128xf32>
    %59 = tpu.matmul %58, %4, %cst_49 {dimension_numbers = #tpu.dot_dimension_numbers<[1], [0], [0], [1], [0, 0, 1, 1], [], []>} : vector<1x128xbf16>, vector<128x128xbf16>, vector<1x128xf32> -> vector<1x128xf32>
    %60 = arith.addf %57, %59 : vector<1x128xf32>
    %61 = math.tanh %60 : vector<1x128xf32>
    %c8_50 = arith.constant 8 : index
    %c0_51 = arith.constant 0 : index
    %62 = vector.load %arg8[%c8_50, %c0_51] : memref<16x128xf32, #tpu.memory_space<vmem>>, vector<1x128xf32>
    tpu.vector_store %arg8[%c8_50, %c0_51], %61 {strides = array<i32>} : memref<16x128xf32, #tpu.memory_space<vmem>>, vector<1x128xf32>,
    %c9 = arith.constant 9 : index
    %c0_52 = arith.constant 0 : index
    %63 = vector.load %arg9[%c9, %c0_52] : memref<16x128xf32, #tpu.memory_space<vmem>>, vector<1x128xf32>
    %64 = arith.truncf %61 : vector<1x128xf32> to vector<1x128xbf16>
    %cst_53 = arith.constant dense<0.000000e+00> : vector<1x128xf32>
    %65 = tpu.matmul %64, %4, %cst_53 {dimension_numbers = #tpu.dot_dimension_numbers<[1], [0], [0], [1], [0, 0, 1, 1], [], []>} : vector<1x128xbf16>, vector<128x128xbf16>, vector<1x128xf32> -> vector<1x128xf32>
    %66 = arith.addf %63, %65 : vector<1x128xf32>
    %67 = math.tanh %66 : vector<1x128xf32>
    %c9_54 = arith.constant 9 : index
    %c0_55 = arith.constant 0 : index
    %68 = vector.load %arg8[%c9_54, %c0_55] : memref<16x128xf32, #tpu.memory_space<vmem>>, vector<1x128xf32>
    tpu.vector_store %arg8[%c9_54, %c0_55], %67 {strides = array<i32>} : memref<16x128xf32, #tpu.memory_space<vmem>>, vector<1x128xf32>,
    %c10 = arith.constant 10 : index
    %c0_56 = arith.constant 0 : index
    %69 = vector.load %arg9[%c10, %c0_56] : memref<16x128xf32, #tpu.memory_space<vmem>>, vector<1x128xf32>
    %70 = arith.truncf %67 : vector<1x128xf32> to vector<1x128xbf16>
    %cst_57 = arith.constant dense<0.000000e+00> : vector<1x128xf32>
    %71 = tpu.matmul %70, %4, %cst_57 {dimension_numbers = #tpu.dot_dimension_numbers<[1], [0], [0], [1], [0, 0, 1, 1], [], []>} : vector<1x128xbf16>, vector<128x128xbf16>, vector<1x128xf32> -> vector<1x128xf32>
    %72 = arith.addf %69, %71 : vector<1x128xf32>
    %73 = math.tanh %72 : vector<1x128xf32>
    %c10_58 = arith.constant 10 : index
    %c0_59 = arith.constant 0 : index
    %74 = vector.load %arg8[%c10_58, %c0_59] : memref<16x128xf32, #tpu.memory_space<vmem>>, vector<1x128xf32>
    tpu.vector_store %arg8[%c10_58, %c0_59], %73 {strides = array<i32>} : memref<16x128xf32, #tpu.memory_space<vmem>>, vector<1x128xf32>,
    %c11 = arith.constant 11 : index
    %c0_60 = arith.constant 0 : index
    %75 = vector.load %arg9[%c11, %c0_60] : memref<16x128xf32, #tpu.memory_space<vmem>>, vector<1x128xf32>
    %76 = arith.truncf %73 : vector<1x128xf32> to vector<1x128xbf16>
    %cst_61 = arith.constant dense<0.000000e+00> : vector<1x128xf32>
    %77 = tpu.matmul %76, %4, %cst_61 {dimension_numbers = #tpu.dot_dimension_numbers<[1], [0], [0], [1], [0, 0, 1, 1], [], []>} : vector<1x128xbf16>, vector<128x128xbf16>, vector<1x128xf32> -> vector<1x128xf32>
    %78 = arith.addf %75, %77 : vector<1x128xf32>
    %79 = math.tanh %78 : vector<1x128xf32>
    %c11_62 = arith.constant 11 : index
    %c0_63 = arith.constant 0 : index
    %80 = vector.load %arg8[%c11_62, %c0_63] : memref<16x128xf32, #tpu.memory_space<vmem>>, vector<1x128xf32>
    tpu.vector_store %arg8[%c11_62, %c0_63], %79 {strides = array<i32>} : memref<16x128xf32, #tpu.memory_space<vmem>>, vector<1x128xf32>,
    %c0_64 = arith.constant 0 : index
    %c0_65 = arith.constant 0 : index
    %81 = vector.load %arg8[%c0_64, %c0_65] : memref<16x128xf32, #tpu.memory_space<vmem>>, vector<12x128xf32>
    %c0_66 = arith.constant 0 : index
    %c0_67 = arith.constant 0 : index
    %82 = vector.load %arg3[%c0_66, %c0_67] : memref<128x128xf32, #tpu.memory_space<vmem>>, vector<128x128xf32>
    %cst_68 = arith.constant dense<0.000000e+00> : vector<12x128xf32>
    %83 = tpu.matmul %81, %82, %cst_68 {dimension_numbers = #tpu.dot_dimension_numbers<[1], [0], [0], [1], [0, 0, 1, 1], [], []>} : vector<12x128xf32>, vector<128x128xf32>, vector<12x128xf32> -> vector<12x128xf32>
    %c0_69 = arith.constant 0 : index
    %c0_70 = arith.constant 0 : index
    %84 = vector.load %arg4[%c0_69, %c0_70] : memref<1x128xf32, #tpu.memory_space<vmem>>, vector<1x128xf32>
    %85 = vector.broadcast %84 : vector<1x128xf32> to vector<12x128xf32>
    %86 = arith.addf %83, %85 : vector<12x128xf32>
    %c0_71 = arith.constant 0 : index
    %c0_72 = arith.constant 0 : index
    %87 = vector.load %arg7[%c0_71, %c0_72] : memref<12x128xf32, #tpu.memory_space<vmem>>, vector<12x128xf32>
    tpu.vector_store %arg7[%c0_71, %c0_72], %86 {strides = array<i32>} : memref<12x128xf32, #tpu.memory_space<vmem>>, vector<12x128xf32>,
    return
  }
}

</mosaic_0001>

<llo_original>
// kernel: tpu_custom_call.1
$region0: #{tpu_custom_call.1}
  #allocation0 [shape = 'u32[]', space=smem, size = 0x4, offset = 0x4, fixed_abs, tag = 'smem constant byte address 0x4 - core index']
  #allocation1 [shape = 'u32[144,128]{1,0:T(1,128)}', space=vmem, size = 0x12000, scoped, tag = 'internal scratch']
  #allocation2 [shape = 'f32[16,128]{1,0:T(8,128)}', space=vmem, size = 0x2000, scoped, tag = 'scratch operand']
  #allocation3 [shape = 'f32[16,128]{1,0:T(8,128)}', space=vmem, size = 0x2000, scoped, tag = 'scratch operand']
  %s0 = inlined_call_operand.vmem [shape: f32[8,4], index: 0, kind: input, shape index: {}]
  %s1 = inlined_call_operand.vmem [shape: f32[4,128], index: 1, kind: input, shape index: {}]
  %s2 = inlined_call_operand.hbm [shape: bf16[128,128], index: 2, kind: input, shape index: {}]
  %s3 = inlined_call_operand.hbm [shape: f32[128,128], index: 3, kind: input, shape index: {}]
  %s4 = inlined_call_operand.vmem [shape: f32[1,128], index: 4, kind: input, shape index: {}]
  %s5 = inlined_call_operand.hbm [shape: f32[128,128], index: 5, kind: input, shape index: {}]
  %s6 = inlined_call_operand.vmem [shape: f32[1,128], index: 6, kind: input, shape index: {}]
  %s7 = inlined_call_operand.hbm [shape: f32[12,128], index: 7, kind: output, shape index: {}]
  %s8 = sld [smem:[#allocation0]]
  $region50: #{tpu_custom_call.1} parent=0
    _
  %s10 = ssub.s32 1, %s8
  %s11 = scalar_select 0, %s10, %s8
  $region1: #{tpu_custom_call.1} parent=0
    #allocation4 [shape = 'u8[32768]{0}', space=vmem, size = 0x8000, scoped, tag = 'input window, operand 2, single buffered']
    #allocation5 [shape = 's32[1]{0}', space=sflag, size = 0x4, scoped, tag = 'scoped memory for tpu_custom_call.1']
    #allocation6 [shape = 's32[1]{0}', space=sflag, size = 0x4, scoped, tag = 'scoped memory for tpu_custom_call.1']
    #allocation7 [shape = 'u8[65536]{0}', space=vmem, size = 0x10000, scoped, tag = 'input window, operand 3, single buffered']
    #allocation8 [shape = 's32[1]{0}', space=sflag, size = 0x4, scoped, tag = 'scoped memory for tpu_custom_call.1']
    #allocation9 [shape = 'u8[65536]{0}', space=vmem, size = 0x10000, scoped, tag = 'input window, operand 5, single buffered']
    #allocation10 [shape = 'u8[8192]{0}', space=vmem, size = 0x2000, scoped, tag = 'output window, operand 0, single buffered']
    %12 = vsyncpa [#allocation5], 0
    %13 = vsyncpa [#allocation8], 0
    %14 = vsyncpa [#allocation6], 0
    // Predicated region
    $region2: #{tpu_custom_call.1} parent=1 // pred_check
      _
    $region3: #{tpu_custom_call.1} parent=1 // pred_check_branch
      %16 = sbr.rel (0) target = $region5
    $region4: #{tpu_custom_call.1} parent=1 // pred_region
      _
    $region5: #{tpu_custom_call.1} parent=1 // pred_fallthru
      _
    // Predicated region
    $region6: #{tpu_custom_call.1} parent=1 // pred_check
      _
    $region7: #{tpu_custom_call.1} parent=1 // pred_check_branch
      %18 = sbr.rel (0) target = $region9
    $region8: #{tpu_custom_call.1} parent=1 // pred_region
      _
    $region9: #{tpu_custom_call.1} parent=1 // pred_fallthru
      _
    // Predicated region
    $region10: #{tpu_custom_call.1} parent=1 // pred_check
      _
    $region11: #{tpu_custom_call.1} parent=1 // pred_check_branch
      %20 = sbr.rel (0) target = $region13
    $region12: #{tpu_custom_call.1} parent=1 // pred_region
      %s22 = ssub.s32 1024, 1024
      %23 = vsyncadd [#allocation5], %s22
      %s24 = sshll.u32 [#allocation4], 4
      %s25 = int_to_ptr.vmem [resolvable:$true] %s24
      %30 = dma.hbm_to_vmem [thread:$0]  %s2, 1024, %s25, [#allocation5], 64, 64, 4
    $region13: #{tpu_custom_call.1} parent=1 // pred_fallthru
      _
    // Predicated region
    $region14: #{tpu_custom_call.1} parent=1 // pred_check
      _
    $region15: #{tpu_custom_call.1} parent=1 // pred_check_branch
      %32 = sbr.rel (0) target = $region17
    $region16: #{tpu_custom_call.1} parent=1 // pred_region
      %s34 = ssub.s32 2048, 2048
      %35 = vsyncadd [#allocation8], %s34
      %s36 = sshll.u32 [#allocation7], 4
      %s37 = int_to_ptr.vmem [resolvable:$true] %s36
      %42 = dma.hbm_to_vmem [thread:$0]  %s3, 2048, %s37, [#allocation8], 128, 128, 8
    $region17: #{tpu_custom_call.1} parent=1 // pred_fallthru
      _
    // Predicated region
    $region18: #{tpu_custom_call.1} parent=1 // pred_check
      _
    $region19: #{tpu_custom_call.1} parent=1 // pred_check_branch
      %44 = sbr.rel (0) target = $region21
    $region20: #{tpu_custom_call.1} parent=1 // pred_region
      _
    $region21: #{tpu_custom_call.1} parent=1 // pred_fallthru
      _
    // Predicated region
    $region22: #{tpu_custom_call.1} parent=1 // pred_check
      _
    $region23: #{tpu_custom_call.1} parent=1 // pred_check_branch
      %46 = sbr.rel (0) target = $region25
    $region24: #{tpu_custom_call.1} parent=1 // pred_region
      %s48 = ssub.s32 2048, 2048
      %49 = vsyncadd [#allocation8], %s48
      %s50 = sshll.u32 [#allocation9], 4
      %s51 = int_to_ptr.vmem [resolvable:$true] %s50
      %56 = dma.hbm_to_vmem [thread:$0]  %s5, 2048, %s51, [#allocation8], 128, 128, 8
    $region25: #{tpu_custom_call.1} parent=1 // pred_fallthru
      _
    // Predicated region
    $region26: #{tpu_custom_call.1} parent=1 // pred_check
      _
    $region27: #{tpu_custom_call.1} parent=1 // pred_check_branch
      %58 = sbr.rel (0) target = $region29
    $region28: #{tpu_custom_call.1} parent=1 // pred_region
      _
    $region29: #{tpu_custom_call.1} parent=1 // pred_fallthru
      _
    // Predicated region
    $region30: #{tpu_custom_call.1} parent=1 // pred_check
      _
    $region31: #{tpu_custom_call.1} parent=1 // pred_check_branch
      %60 = sbr.rel (0) target = $region33
    $region32: #{tpu_custom_call.1} parent=1 // pred_region
      %61 = dma.done [#allocation5], 1024
    $region33: #{tpu_custom_call.1} parent=1 // pred_fallthru
      _
    // Predicated region
    $region34: #{tpu_custom_call.1} parent=1 // pred_check
      _
    $region35: #{tpu_custom_call.1} parent=1 // pred_check_branch
      %63 = sbr.rel (0) target = $region37
    $region36: #{tpu_custom_call.1} parent=1 // pred_region
      %64 = dma.done [#allocation8], 2048
    $region37: #{tpu_custom_call.1} parent=1 // pred_fallthru
      _
    // Predicated region
    $region38: #{tpu_custom_call.1} parent=1 // pred_check
      _
    $region39: #{tpu_custom_call.1} parent=1 // pred_check_branch
      %66 = sbr.rel (0) target = $region41
    $region40: #{tpu_custom_call.1} parent=1 // pred_region
      %67 = dma.done [#allocation8], 2048
    $region41: #{tpu_custom_call.1} parent=1 // pred_fallthru
      _
    %v69 = vld [vmem:[%s0] sm:$0xff]
    %v70 = vld [vmem:[%s1] sm:$0xf]
    %vm71 = vcmask 31744
    %v73 = vsel %vm71, %v69, 0
    %vm75 = vcmask 1043456
    %v77 = vsel %vm75, %v70, 0
    %79 = vmatprep.subr.mxu0 0.0
    %80 = vmatpush1.msra.mxu0 0.0
    %81 = vmatprep.subr.mxu0 0.0
    %82 = vmatpush1.msra.mxu0 0.0
    %83 = vmatprep.subr.mxu0 0.0
    %84 = vmatpush1.msra.mxu0 0.0
    %85 = vmatprep.subr.mxu0 0.0
    %86 = vmatpush1.msra.mxu0 0.0
    %87 = vmatprep.subr.mxu0 0.0
    %88 = vmatpush1.msra.mxu0 0.0
    %89 = vmatprep.subr.mxu0 0.0
    %90 = vmatpush1.msra.mxu0 0.0
    %91 = vmatprep.subr.mxu0 0.0
    %92 = vmatpush1.msra.mxu0 0.0
    %93 = vmatprep.subr.mxu0 0.0
    %94 = vmatpush1.msra.mxu0 0.0
    %95 = vmatprep.subr.mxu0 0.0
    %96 = vmatpush1.msra.mxu0 0.0
    %97 = vmatprep.subr.mxu0 0.0
    %98 = vmatpush1.msra.mxu0 0.0
    %99 = vmatprep.subr.mxu0 0.0
    %100 = vmatpush1.msra.mxu0 0.0
    %101 = vmatprep.subr.mxu0 0.0
    %102 = vmatpush1.msra.mxu0 0.0
    %103 = vmatprep.subr.mxu0 0.0
    %104 = vmatpush1.msra.mxu0 0.0
    %105 = vmatprep.subr.mxu0 0.0
    %106 = vmatpush1.msra.mxu0 0.0
    %107 = vmatprep.subr.mxu0 0.0
    %108 = vmatpush1.msra.mxu0 0.0
    %109 = vmatprep.subr.mxu0 0.0
    %110 = vmatpush1.msra.mxu0 %v77
    %111 = vmatprep.subr.mxu0 0.0
    %112 = vmatpush2.msra.mxu0 0.0
    %113 = vmatprep.subr.mxu0 0.0
    %114 = vmatpush2.msra.mxu0 0.0
    %115 = vmatprep.subr.mxu0 0.0
    %116 = vmatpush2.msra.mxu0 0.0
    %117 = vmatprep.subr.mxu0 0.0
    %118 = vmatpush2.msra.mxu0 0.0
    %119 = vmatprep.subr.mxu0 0.0
    %120 = vmatpush2.msra.mxu0 0.0
    %121 = vmatprep.subr.mxu0 0.0
    %122 = vmatpush2.msra.mxu0 0.0
    %123 = vmatprep.subr.mxu0 0.0
    %124 = vmatpush2.msra.mxu0 0.0
    %125 = vmatprep.subr.mxu0 0.0
    %126 = vmatpush2.msra.mxu0 0.0
    %127 = vmatprep.subr.mxu0 0.0
    %128 = vmatpush2.msra.mxu0 0.0
    %129 = vmatprep.subr.mxu0 0.0
    %130 = vmatpush2.msra.mxu0 0.0
    %131 = vmatprep.subr.mxu0 0.0
    %132 = vmatpush2.msra.mxu0 0.0
    %133 = vmatprep.subr.mxu0 0.0
    %134 = vmatpush2.msra.mxu0 0.0
    %135 = vmatprep.subr.mxu0 0.0
    %136 = vmatpush2.msra.mxu0 0.0
    %137 = vmatprep.subr.mxu0 0.0
    %138 = vmatpush2.msra.mxu0 0.0
    %139 = vmatprep.subr.mxu0 0.0
    %140 = vmatpush2.msra.mxu0 0.0
    %141 = vmatprep.subr.mxu0 0.0
    %142 = vmatpush2.msra.mxu0 0.0
    %143 = vmatprep.mubr.f32.mxu0 0.0
    %144 = vmatmul.mubr.f32.gmra.mxu0 %v73
    %v145 = vpop.f32.mrf.mxu0
    %v146 = vadd.f32 0.0, %v145
    %v147 = vpop.f32.mrf.mxu0
    %148 = vdwg.mxu0
    %149 = vst [vmem:[#allocation3] sm:$0xff] %v146
    %v150 = vld [vmem:[#allocation4] sm:$0xf]
    %v151 = vld [vmem:[#allocation4 + $0x4] sm:$0xf]
    %v152 = vld [vmem:[#allocation4 + $0x8] sm:$0xf]
    %v153 = vld [vmem:[#allocation4 + $0xc] sm:$0xf]
    %v154 = vld [vmem:[#allocation4 + $0x10] sm:$0xf]
    %v155 = vld [vmem:[#allocation4 + $0x14] sm:$0xf]
    %v156 = vld [vmem:[#allocation4 + $0x18] sm:$0xf]
    %v157 = vld [vmem:[#allocation4 + $0x1c] sm:$0xf]
    %v158 = vld [vmem:[#allocation4 + $0x20] sm:$0xf]
    %v159 = vld [vmem:[#allocation4 + $0x24] sm:$0xf]
    %v160 = vld [vmem:[#allocation4 + $0x28] sm:$0xf]
    %v161 = vld [vmem:[#allocation4 + $0x2c] sm:$0xf]
    %v162 = vld [vmem:[#allocation4 + $0x30] sm:$0xf]
    %v163 = vld [vmem:[#allocation4 + $0x34] sm:$0xf]
    %v164 = vld [vmem:[#allocation4 + $0x38] sm:$0xf]
    %v165 = vld [vmem:[#allocation4 + $0x3c] sm:$0xf]
    %v166 = vld [vmem:[#allocation3] sm:$0x1]
    %v167 = vtanh.pop %v166
    %168 = vst [vmem:[#allocation2] sm:$0x1] %v167
    %v169 = vld [vmem:[#allocation3 + $0x1] sm:$0x1]
    %v170 = vpack.c.bf16 %v167, %v167
    %v187 = vunpack.c.l.b16 %v150
    %v188 = vunpack.c.l.b16 %v151
    %v189 = vunpack.c.l.b16 %v152
    %v190 = vunpack.c.l.b16 %v153
    %v191 = vunpack.c.l.b16 %v154
    %v192 = vunpack.c.l.b16 %v155
    %v193 = vunpack.c.l.b16 %v156
    %v194 = vunpack.c.l.b16 %v157
    %v195 = vunpack.c.l.b16 %v158
    %v196 = vunpack.c.l.b16 %v159
    %v197 = vunpack.c.l.b16 %v160
    %v198 = vunpack.c.l.b16 %v161
    %v199 = vunpack.c.l.b16 %v162
    %v200 = vunpack.c.l.b16 %v163
    %v201 = vunpack.c.l.b16 %v164
    %v202 = vunpack.c.l.b16 %v165
    %v203 = vpack.c.b16 %v188, %v187
    %v204 = vpack.c.b16 %v190, %v189
    %v205 = vpack.c.b16 %v192, %v191
    %v206 = vpack.c.b16 %v194, %v193
    %v207 = vpack.c.b16 %v196, %v195
    %v208 = vpack.c.b16 %v198, %v197
    %v209 = vpack.c.b16 %v200, %v199
    %v210 = vpack.c.b16 %v202, %v201
    %219 = vmatprep.subr.bf16.mxu0 0
    %220 = vmatpush1.bf16.msra.mxu0 %v210
    %221 = vmatprep.subr.bf16.mxu0 0
    %222 = vmatpush1.bf16.msra.mxu0 %v209
    %223 = vmatprep.subr.bf16.mxu0 0
    %224 = vmatpush1.bf16.msra.mxu0 %v208
    %225 = vmatprep.subr.bf16.mxu0 0
    %226 = vmatpush1.bf16.msra.mxu0 %v207
    %227 = vmatprep.subr.bf16.mxu0 0
    %228 = vmatpush1.bf16.msra.mxu0 %v206
    %229 = vmatprep.subr.bf16.mxu0 0
    %230 = vmatpush1.bf16.msra.mxu0 %v205
    %231 = vmatprep.subr.bf16.mxu0 0
    %232 = vmatpush1.bf16.msra.mxu0 %v204
    %233 = vmatprep.subr.bf16.mxu0 0
    %234 = vmatpush1.bf16.msra.mxu0 %v203
    %235 = vmatprep.subr.bf16.mxu0 0
    %236 = vmatpush2.bf16.msra.mxu0 0
    %237 = vmatprep.subr.bf16.mxu0 0
    %238 = vmatpush2.bf16.msra.mxu0 0
    %239 = vmatprep.subr.bf16.mxu0 0
    %240 = vmatpush2.bf16.msra.mxu0 0
    %241 = vmatprep.subr.bf16.mxu0 0
    %242 = vmatpush2.bf16.msra.mxu0 0
    %243 = vmatprep.subr.bf16.mxu0 0
    %244 = vmatpush2.bf16.msra.mxu0 0
    %245 = vmatprep.subr.bf16.mxu0 0
    %246 = vmatpush2.bf16.msra.mxu0 0
    %247 = vmatprep.subr.bf16.mxu0 0
    %248 = vmatpush2.bf16.msra.mxu0 0
    %249 = vmatprep.subr.bf16.mxu0 0
    %250 = vmatpush2.bf16.msra.mxu0 0
    %251 = vmatprep.mubr.bf16.mxu0 0
    %252 = vmatmul.mubr.bf16.gmra.mxu0 %v170
    %v253 = vpop.f32.mrf.mxu0
    %v254 = vadd.f32 0.0, %v253
    %v255 = vpop.f32.mrf.mxu0
    %v256 = vpop.f32.mrf.mxu0
    %v257 = vpop.f32.mrf.mxu0
    %258 = vdwg.mxu0
    %v259 = vadd.f32 %v169, %v254
    %v260 = vtanh.pop %v259
    %261 = vst [vmem:[#allocation2 + $0x1] sm:$0x1] %v260
    %v262 = vld [vmem:[#allocation3 + $0x2] sm:$0x1]
    %v263 = vpack.c.bf16 %v260, %v260
    %264 = vmatprep.subr.bf16.mxu0 0
    %265 = vmatpush1.bf16.msra.mxu0 %v210
    %266 = vmatprep.subr.bf16.mxu0 0
    %267 = vmatpush1.bf16.msra.mxu0 %v209
    %268 = vmatprep.subr.bf16.mxu0 0
    %269 = vmatpush1.bf16.msra.mxu0 %v208
    %270 = vmatprep.subr.bf16.mxu0 0
    %271 = vmatpush1.bf16.msra.mxu0 %v207
    %272 = vmatprep.subr.bf16.mxu0 0
    %273 = vmatpush1.bf16.msra.mxu0 %v206
    %274 = vmatprep.subr.bf16.mxu0 0
    %275 = vmatpush1.bf16.msra.mxu0 %v205
    %276 = vmatprep.subr.bf16.mxu0 0
    %277 = vmatpush1.bf16.msra.mxu0 %v204
    %278 = vmatprep.subr.bf16.mxu0 0
    %279 = vmatpush1.bf16.msra.mxu0 %v203
    %280 = vmatprep.subr.bf16.mxu0 0
    %281 = vmatpush2.bf16.msra.mxu0 0
    %282 = vmatprep.subr.bf16.mxu0 0
    %283 = vmatpush2.bf16.msra.mxu0 0
    %284 = vmatprep.subr.bf16.mxu0 0
    %285 = vmatpush2.bf16.msra.mxu0 0
    %286 = vmatprep.subr.bf16.mxu0 0
    %287 = vmatpush2.bf16.msra.mxu0 0
    %288 = vmatprep.subr.bf16.mxu0 0
    %289 = vmatpush2.bf16.msra.mxu0 0
    %290 = vmatprep.subr.bf16.mxu0 0
    %291 = vmatpush2.bf16.msra.mxu0 0
    %292 = vmatprep.subr.bf16.mxu0 0
    %293 = vmatpush2.bf16.msra.mxu0 0
    %294 = vmatprep.subr.bf16.mxu0 0
    %295 = vmatpush2.bf16.msra.mxu0 0
    %296 = vmatprep.mubr.bf16.mxu0 0
    %297 = vmatmul.mubr.bf16.gmra.mxu0 %v263
    %v298 = vpop.f32.mrf.mxu0
    %v299 = vadd.f32 0.0, %v298
    %v300 = vpop.f32.mrf.mxu0
    %v301 = vpop.f32.mrf.mxu0
    %v302 = vpop.f32.mrf.mxu0
    %303 = vdwg.mxu0
    %v304 = vadd.f32 %v262, %v299
    %v305 = vtanh.pop %v304
    %306 = vst [vmem:[#allocation2 + $0x2] sm:$0x1] %v305
    %v307 = vld [vmem:[#allocation3 + $0x3] sm:$0x1]
    %v308 = vpack.c.bf16 %v305, %v305
    %309 = vmatprep.subr.bf16.mxu0 0
    %310 = vmatpush1.bf16.msra.mxu0 %v210
    %311 = vmatprep.subr.bf16.mxu0 0
    %312 = vmatpush1.bf16.msra.mxu0 %v209
    %313 = vmatprep.subr.bf16.mxu0 0
    %314 = vmatpush1.bf16.msra.mxu0 %v208
    %315 = vmatprep.subr.bf16.mxu0 0
    %316 = vmatpush1.bf16.msra.mxu0 %v207
    %317 = vmatprep.subr.bf16.mxu0 0
    %318 = vmatpush1.bf16.msra.mxu0 %v206
    %319 = vmatprep.subr.bf16.mxu0 0
    %320 = vmatpush1.bf16.msra.mxu0 %v205
    %321 = vmatprep.subr.bf16.mxu0 0
    %322 = vmatpush1.bf16.msra.mxu0 %v204
    %323 = vmatprep.subr.bf16.mxu0 0
    %324 = vmatpush1.bf16.msra.mxu0 %v203
    %325 = vmatprep.subr.bf16.mxu0 0
    %326 = vmatpush2.bf16.msra.mxu0 0
    %327 = vmatprep.subr.bf16.mxu0 0
    %328 = vmatpush2.bf16.msra.mxu0 0
    %329 = vmatprep.subr.bf16.mxu0 0
    %330 = vmatpush2.bf16.msra.mxu0 0
    %331 = vmatprep.subr.bf16.mxu0 0
    %332 = vmatpush2.bf16.msra.mxu0 0
    %333 = vmatprep.subr.bf16.mxu0 0
    %334 = vmatpush2.bf16.msra.mxu0 0
    %335 = vmatprep.subr.bf16.mxu0 0
    %336 = vmatpush2.bf16.msra.mxu0 0
    %337 = vmatprep.subr.bf16.mxu0 0
    %338 = vmatpush2.bf16.msra.mxu0 0
    %339 = vmatprep.subr.bf16.mxu0 0
    %340 = vmatpush2.bf16.msra.mxu0 0
    %341 = vmatprep.mubr.bf16.mxu0 0
    %342 = vmatmul.mubr.bf16.gmra.mxu0 %v308
    %v343 = vpop.f32.mrf.mxu0
    %v344 = vadd.f32 0.0, %v343
    %v345 = vpop.f32.mrf.mxu0
    %v346 = vpop.f32.mrf.mxu0
    %v347 = vpop.f32.mrf.mxu0
    %348 = vdwg.mxu0
    %v349 = vadd.f32 %v307, %v344
    %v350 = vtanh.pop %v349
    %351 = vst [vmem:[#allocation2 + $0x3] sm:$0x1] %v350
    %v352 = vld [vmem:[#allocation3 + $0x4] sm:$0x1]
    %v353 = vpack.c.bf16 %v350, %v350
    %354 = vmatprep.subr.bf16.mxu0 0
    %355 = vmatpush1.bf16.msra.mxu0 %v210
    %356 = vmatprep.subr.bf16.mxu0 0
    %357 = vmatpush1.bf16.msra.mxu0 %v209
    %358 = vmatprep.subr.bf16.mxu0 0
    %359 = vmatpush1.bf16.msra.mxu0 %v208
    %360 = vmatprep.subr.bf16.mxu0 0
    %361 = vmatpush1.bf16.msra.mxu0 %v207
    %362 = vmatprep.subr.bf16.mxu0 0
    %363 = vmatpush1.bf16.msra.mxu0 %v206
    %364 = vmatprep.subr.bf16.mxu0 0
    %365 = vmatpush1.bf16.msra.mxu0 %v205
    %366 = vmatprep.subr.bf16.mxu0 0
    %367 = vmatpush1.bf16.msra.mxu0 %v204
    %368 = vmatprep.subr.bf16.mxu0 0
    %369 = vmatpush1.bf16.msra.mxu0 %v203
    %370 = vmatprep.subr.bf16.mxu0 0
    %371 = vmatpush2.bf16.msra.mxu0 0
    %372 = vmatprep.subr.bf16.mxu0 0
    %373 = vmatpush2.bf16.msra.mxu0 0
    %374 = vmatprep.subr.bf16.mxu0 0
    %375 = vmatpush2.bf16.msra.mxu0 0
    %376 = vmatprep.subr.bf16.mxu0 0
    %377 = vmatpush2.bf16.msra.mxu0 0
    %378 = vmatprep.subr.bf16.mxu0 0
    %379 = vmatpush2.bf16.msra.mxu0 0
    %380 = vmatprep.subr.bf16.mxu0 0
    %381 = vmatpush2.bf16.msra.mxu0 0
    %382 = vmatprep.subr.bf16.mxu0 0
    %383 = vmatpush2.bf16.msra.mxu0 0
    %384 = vmatprep.subr.bf16.mxu0 0
    %385 = vmatpush2.bf16.msra.mxu0 0
    %386 = vmatprep.mubr.bf16.mxu0 0
    %387 = vmatmul.mubr.bf16.gmra.mxu0 %v353
    %v388 = vpop.f32.mrf.mxu0
    %v389 = vadd.f32 0.0, %v388
    %v390 = vpop.f32.mrf.mxu0
    %v391 = vpop.f32.mrf.mxu0
    %v392 = vpop.f32.mrf.mxu0
    %393 = vdwg.mxu0
    %v394 = vadd.f32 %v352, %v389
    %v395 = vtanh.pop %v394
    %396 = vst [vmem:[#allocation2 + $0x4] sm:$0x1] %v395
    %v397 = vld [vmem:[#allocation3 + $0x5] sm:$0x1]
    %v398 = vpack.c.bf16 %v395, %v395
    %399 = vmatprep.subr.bf16.mxu0 0
    %400 = vmatpush1.bf16.msra.mxu0 %v210
    %401 = vmatprep.subr.bf16.mxu0 0
    %402 = vmatpush1.bf16.msra.mxu0 %v209
    %403 = vmatprep.subr.bf16.mxu0 0
    %404 = vmatpush1.bf16.msra.mxu0 %v208
    %405 = vmatprep.subr.bf16.mxu0 0
    %406 = vmatpush1.bf16.msra.mxu0 %v207
    %407 = vmatprep.subr.bf16.mxu0 0
    %408 = vmatpush1.bf16.msra.mxu0 %v206
    %409 = vmatprep.subr.bf16.mxu0 0
    %410 = vmatpush1.bf16.msra.mxu0 %v205
    %411 = vmatprep.subr.bf16.mxu0 0
    %412 = vmatpush1.bf16.msra.mxu0 %v204
    %413 = vmatprep.subr.bf16.mxu0 0
    %414 = vmatpush1.bf16.msra.mxu0 %v203
    %415 = vmatprep.subr.bf16.mxu0 0
    %416 = vmatpush2.bf16.msra.mxu0 0
    %417 = vmatprep.subr.bf16.mxu0 0
    %418 = vmatpush2.bf16.msra.mxu0 0
    %419 = vmatprep.subr.bf16.mxu0 0
    %420 = vmatpush2.bf16.msra.mxu0 0
    %421 = vmatprep.subr.bf16.mxu0 0
    %422 = vmatpush2.bf16.msra.mxu0 0
    %423 = vmatprep.subr.bf16.mxu0 0
    %424 = vmatpush2.bf16.msra.mxu0 0
    %425 = vmatprep.subr.bf16.mxu0 0
    %426 = vmatpush2.bf16.msra.mxu0 0
    %427 = vmatprep.subr.bf16.mxu0 0
    %428 = vmatpush2.bf16.msra.mxu0 0
    %429 = vmatprep.subr.bf16.mxu0 0
    %430 = vmatpush2.bf16.msra.mxu0 0
    %431 = vmatprep.mubr.bf16.mxu0 0
    %432 = vmatmul.mubr.bf16.gmra.mxu0 %v398
    %v433 = vpop.f32.mrf.mxu0
    %v434 = vadd.f32 0.0, %v433
    %v435 = vpop.f32.mrf.mxu0
    %v436 = vpop.f32.mrf.mxu0
    %v437 = vpop.f32.mrf.mxu0
    %438 = vdwg.mxu0
    %v439 = vadd.f32 %v397, %v434
    %v440 = vtanh.pop %v439
    %441 = vst [vmem:[#allocation2 + $0x5] sm:$0x1] %v440
    %v442 = vld [vmem:[#allocation3 + $0x6] sm:$0x1]
    %v443 = vpack.c.bf16 %v440, %v440
    %444 = vmatprep.subr.bf16.mxu0 0
    %445 = vmatpush1.bf16.msra.mxu0 %v210
    %446 = vmatprep.subr.bf16.mxu0 0
    %447 = vmatpush1.bf16.msra.mxu0 %v209
    %448 = vmatprep.subr.bf16.mxu0 0
    %449 = vmatpush1.bf16.msra.mxu0 %v208
    %450 = vmatprep.subr.bf16.mxu0 0
    %451 = vmatpush1.bf16.msra.mxu0 %v207
    %452 = vmatprep.subr.bf16.mxu0 0
    %453 = vmatpush1.bf16.msra.mxu0 %v206
    %454 = vmatprep.subr.bf16.mxu0 0
    %455 = vmatpush1.bf16.msra.mxu0 %v205
    %456 = vmatprep.subr.bf16.mxu0 0
    %457 = vmatpush1.bf16.msra.mxu0 %v204
    %458 = vmatprep.subr.bf16.mxu0 0
    %459 = vmatpush1.bf16.msra.mxu0 %v203
    %460 = vmatprep.subr.bf16.mxu0 0
    %461 = vmatpush2.bf16.msra.mxu0 0
    %462 = vmatprep.subr.bf16.mxu0 0
    %463 = vmatpush2.bf16.msra.mxu0 0
    %464 = vmatprep.subr.bf16.mxu0 0
    %465 = vmatpush2.bf16.msra.mxu0 0
    %466 = vmatprep.subr.bf16.mxu0 0
    %467 = vmatpush2.bf16.msra.mxu0 0
    %468 = vmatprep.subr.bf16.mxu0 0
    %469 = vmatpush2.bf16.msra.mxu0 0
    %470 = vmatprep.subr.bf16.mxu0 0
    %471 = vmatpush2.bf16.msra.mxu0 0
    %472 = vmatprep.subr.bf16.mxu0 0
    %473 = vmatpush2.bf16.msra.mxu0 0
    %474 = vmatprep.subr.bf16.mxu0 0
    %475 = vmatpush2.bf16.msra.mxu0 0
    %476 = vmatprep.mubr.bf16.mxu0 0
    %477 = vmatmul.mubr.bf16.gmra.mxu0 %v443
    %v478 = vpop.f32.mrf.mxu0
    %v479 = vadd.f32 0.0, %v478
    %v480 = vpop.f32.mrf.mxu0
    %v481 = vpop.f32.mrf.mxu0
    %v482 = vpop.f32.mrf.mxu0
    %483 = vdwg.mxu0
    %v484 = vadd.f32 %v442, %v479
    %v485 = vtanh.pop %v484
    %486 = vst [vmem:[#allocation2 + $0x6] sm:$0x1] %v485
    %v487 = vld [vmem:[#allocation3 + $0x7] sm:$0x1]
    %v488 = vpack.c.bf16 %v485, %v485
    %489 = vmatprep.subr.bf16.mxu0 0
    %490 = vmatpush1.bf16.msra.mxu0 %v210
    %491 = vmatprep.subr.bf16.mxu0 0
    %492 = vmatpush1.bf16.msra.mxu0 %v209
    %493 = vmatprep.subr.bf16.mxu0 0
    %494 = vmatpush1.bf16.msra.mxu0 %v208
    %495 = vmatprep.subr.bf16.mxu0 0
    %496 = vmatpush1.bf16.msra.mxu0 %v207
    %497 = vmatprep.subr.bf16.mxu0 0
    %498 = vmatpush1.bf16.msra.mxu0 %v206
    %499 = vmatprep.subr.bf16.mxu0 0
    %500 = vmatpush1.bf16.msra.mxu0 %v205
    %501 = vmatprep.subr.bf16.mxu0 0
    %502 = vmatpush1.bf16.msra.mxu0 %v204
    %503 = vmatprep.subr.bf16.mxu0 0
    %504 = vmatpush1.bf16.msra.mxu0 %v203
    %505 = vmatprep.subr.bf16.mxu0 0
    %506 = vmatpush2.bf16.msra.mxu0 0
    %507 = vmatprep.subr.bf16.mxu0 0
    %508 = vmatpush2.bf16.msra.mxu0 0
    %509 = vmatprep.subr.bf16.mxu0 0
    %510 = vmatpush2.bf16.msra.mxu0 0
    %511 = vmatprep.subr.bf16.mxu0 0
    %512 = vmatpush2.bf16.msra.mxu0 0
    %513 = vmatprep.subr.bf16.mxu0 0
    %514 = vmatpush2.bf16.msra.mxu0 0
    %515 = vmatprep.subr.bf16.mxu0 0
    %516 = vmatpush2.bf16.msra.mxu0 0
    %517 = vmatprep.subr.bf16.mxu0 0
    %518 = vmatpush2.bf16.msra.mxu0 0
    %519 = vmatprep.subr.bf16.mxu0 0
    %520 = vmatpush2.bf16.msra.mxu0 0
    %521 = vmatprep.mubr.bf16.mxu0 0
    %522 = vmatmul.mubr.bf16.gmra.mxu0 %v488
    %v523 = vpop.f32.mrf.mxu0
    %v524 = vadd.f32 0.0, %v523
    %v525 = vpop.f32.mrf.mxu0
    %v526 = vpop.f32.mrf.mxu0
    %v527 = vpop.f32.mrf.mxu0
    %528 = vdwg.mxu0
    %v529 = vadd.f32 %v487, %v524
    %v530 = vtanh.pop %v529
    %531 = vst [vmem:[#allocation2 + $0x7] sm:$0x1] %v530
    %v532 = vld [vmem:[#allocation2] sm:$0xf]
    %v533 = vld [vmem:[#allocation9] sm:$0xff]
    %v534 = vld [vmem:[#allocation9 + $0x8] sm:$0xff]
    %v535 = vld [vmem:[#allocation9 + $0x10] sm:$0xff]
    %v536 = vld [vmem:[#allocation9 + $0x18] sm:$0xff]
    %v537 = vld [vmem:[#allocation9 + $0x20] sm:$0xff]
    %v538 = vld [vmem:[#allocation9 + $0x28] sm:$0xff]
    %v539 = vld [vmem:[#allocation9 + $0x30] sm:$0xff]
    %v540 = vld [vmem:[#allocation9 + $0x38] sm:$0xff]
    %v541 = vld [vmem:[#allocation9 + $0x40] sm:$0xff]
    %v542 = vld [vmem:[#allocation9 + $0x48] sm:$0xff]
    %v543 = vld [vmem:[#allocation9 + $0x50] sm:$0xff]
    %v544 = vld [vmem:[#allocation9 + $0x58] sm:$0xff]
    %v545 = vld [vmem:[#allocation9 + $0x60] sm:$0xff]
    %v546 = vld [vmem:[#allocation9 + $0x68] sm:$0xff]
    %v547 = vld [vmem:[#allocation9 + $0x70] sm:$0xff]
    %v548 = vld [vmem:[#allocation9 + $0x78] sm:$0xff]
    %v549 = vld [vmem:[%s6] sm:$0x1]
    %v551 = vlaneseq
    %v552 = vshrl.u32 %v551, 7
    %v553 = vsub.s32 0, %v552
    %v554 = vrot.slane %v549, %v553
    %556 = vmatprep.subr.mxu0 0.0
    %557 = vmatpush1.msra.mxu0 %v548
    %558 = vmatprep.subr.mxu0 0.0
    %559 = vmatpush1.msra.mxu0 %v547
    %560 = vmatprep.subr.mxu0 0.0
    %561 = vmatpush1.msra.mxu0 %v546
    %562 = vmatprep.subr.mxu0 0.0
    %563 = vmatpush1.msra.mxu0 %v545
    %564 = vmatprep.subr.mxu0 0.0
    %565 = vmatpush1.msra.mxu0 %v544
    %566 = vmatprep.subr.mxu0 0.0
    %567 = vmatpush1.msra.mxu0 %v543
    %568 = vmatprep.subr.mxu0 0.0
    %569 = vmatpush1.msra.mxu0 %v542
    %570 = vmatprep.subr.mxu0 0.0
    %571 = vmatpush1.msra.mxu0 %v541
    %572 = vmatprep.subr.mxu0 0.0
    %573 = vmatpush1.msra.mxu0 %v540
    %574 = vmatprep.subr.mxu0 0.0
    %575 = vmatpush1.msra.mxu0 %v539
    %576 = vmatprep.subr.mxu0 0.0
    %577 = vmatpush1.msra.mxu0 %v538
    %578 = vmatprep.subr.mxu0 0.0
    %579 = vmatpush1.msra.mxu0 %v537
    %580 = vmatprep.subr.mxu0 0.0
    %581 = vmatpush1.msra.mxu0 %v536
    %582 = vmatprep.subr.mxu0 0.0
    %583 = vmatpush1.msra.mxu0 %v535
    %584 = vmatprep.subr.mxu0 0.0
    %585 = vmatpush1.msra.mxu0 %v534
    %586 = vmatprep.subr.mxu0 0.0
    %587 = vmatpush1.msra.mxu0 %v533
    %588 = vmatprep.subr.mxu0 0.0
    %589 = vmatpush2.msra.mxu0 0.0
    %590 = vmatprep.subr.mxu0 0.0
    %591 = vmatpush2.msra.mxu0 0.0
    %592 = vmatprep.subr.mxu0 0.0
    %593 = vmatpush2.msra.mxu0 0.0
    %594 = vmatprep.subr.mxu0 0.0
    %595 = vmatpush2.msra.mxu0 0.0
    %596 = vmatprep.subr.mxu0 0.0
    %597 = vmatpush2.msra.mxu0 0.0
    %598 = vmatprep.subr.mxu0 0.0
    %599 = vmatpush2.msra.mxu0 0.0
    %600 = vmatprep.subr.mxu0 0.0
    %601 = vmatpush2.msra.mxu0 0.0
    %602 = vmatprep.subr.mxu0 0.0
    %603 = vmatpush2.msra.mxu0 0.0
    %604 = vmatprep.subr.mxu0 0.0
    %605 = vmatpush2.msra.mxu0 0.0
    %606 = vmatprep.subr.mxu0 0.0
    %607 = vmatpush2.msra.mxu0 0.0
    %608 = vmatprep.subr.mxu0 0.0
    %609 = vmatpush2.msra.mxu0 0.0
    %610 = vmatprep.subr.mxu0 0.0
    %611 = vmatpush2.msra.mxu0 0.0
    %612 = vmatprep.subr.mxu0 0.0
    %613 = vmatpush2.msra.mxu0 0.0
    %614 = vmatprep.subr.mxu0 0.0
    %615 = vmatpush2.msra.mxu0 0.0
    %616 = vmatprep.subr.mxu0 0.0
    %617 = vmatpush2.msra.mxu0 0.0
    %618 = vmatprep.subr.mxu0 0.0
    %619 = vmatpush2.msra.mxu0 0.0
    %620 = vmatprep.mubr.f32.mxu0 0.0
    %621 = vmatmul.mubr.f32.gmra.mxu0 %v532
    %v622 = vpop.f32.mrf.mxu0
    %v623 = vadd.f32 %v554, %v622
    %v624 = vpop.f32.mrf.mxu0
    %625 = vdwg.mxu0
    %626 = vst [vmem:[#allocation3 + $0x8] sm:$0xf] %v623
    %v627 = vld [vmem:[#allocation3 + $0x8] sm:$0x1]
    %v628 = vpack.c.bf16 %v530, %v530
    %629 = vmatprep.subr.bf16.mxu0 0
    %630 = vmatpush1.bf16.msra.mxu0 %v210
    %631 = vmatprep.subr.bf16.mxu0 0
    %632 = vmatpush1.bf16.msra.mxu0 %v209
    %633 = vmatprep.subr.bf16.mxu0 0
    %634 = vmatpush1.bf16.msra.mxu0 %v208
    %635 = vmatprep.subr.bf16.mxu0 0
    %636 = vmatpush1.bf16.msra.mxu0 %v207
    %637 = vmatprep.subr.bf16.mxu0 0
    %638 = vmatpush1.bf16.msra.mxu0 %v206
    %639 = vmatprep.subr.bf16.mxu0 0
    %640 = vmatpush1.bf16.msra.mxu0 %v205
    %641 = vmatprep.subr.bf16.mxu0 0
    %642 = vmatpush1.bf16.msra.mxu0 %v204
    %643 = vmatprep.subr.bf16.mxu0 0
    %644 = vmatpush1.bf16.msra.mxu0 %v203
    %645 = vmatprep.subr.bf16.mxu0 0
    %646 = vmatpush2.bf16.msra.mxu0 0
    %647 = vmatprep.subr.bf16.mxu0 0
    %648 = vmatpush2.bf16.msra.mxu0 0
    %649 = vmatprep.subr.bf16.mxu0 0
    %650 = vmatpush2.bf16.msra.mxu0 0
    %651 = vmatprep.subr.bf16.mxu0 0
    %652 = vmatpush2.bf16.msra.mxu0 0
    %653 = vmatprep.subr.bf16.mxu0 0
    %654 = vmatpush2.bf16.msra.mxu0 0
    %655 = vmatprep.subr.bf16.mxu0 0
    %656 = vmatpush2.bf16.msra.mxu0 0
    %657 = vmatprep.subr.bf16.mxu0 0
    %658 = vmatpush2.bf16.msra.mxu0 0
    %659 = vmatprep.subr.bf16.mxu0 0
    %660 = vmatpush2.bf16.msra.mxu0 0
    %661 = vmatprep.mubr.bf16.mxu0 0
    %662 = vmatmul.mubr.bf16.gmra.mxu0 %v628
    %v663 = vpop.f32.mrf.mxu0
    %v664 = vadd.f32 0.0, %v663
    %v665 = vpop.f32.mrf.mxu0
    %v666 = vpop.f32.mrf.mxu0
    %v667 = vpop.f32.mrf.mxu0
    %668 = vdwg.mxu0
    %v669 = vadd.f32 %v627, %v664
    %v670 = vtanh.pop %v669
    %671 = vst [vmem:[#allocation2 + $0x8] sm:$0x1] %v670
    %v672 = vld [vmem:[#allocation3 + $0x9] sm:$0x1]
    %v673 = vpack.c.bf16 %v670, %v670
    %674 = vmatprep.subr.bf16.mxu0 0
    %675 = vmatpush1.bf16.msra.mxu0 %v210
    %676 = vmatprep.subr.bf16.mxu0 0
    %677 = vmatpush1.bf16.msra.mxu0 %v209
    %678 = vmatprep.subr.bf16.mxu0 0
    %679 = vmatpush1.bf16.msra.mxu0 %v208
    %680 = vmatprep.subr.bf16.mxu0 0
    %681 = vmatpush1.bf16.msra.mxu0 %v207
    %682 = vmatprep.subr.bf16.mxu0 0
    %683 = vmatpush1.bf16.msra.mxu0 %v206
    %684 = vmatprep.subr.bf16.mxu0 0
    %685 = vmatpush1.bf16.msra.mxu0 %v205
    %686 = vmatprep.subr.bf16.mxu0 0
    %687 = vmatpush1.bf16.msra.mxu0 %v204
    %688 = vmatprep.subr.bf16.mxu0 0
    %689 = vmatpush1.bf16.msra.mxu0 %v203
    %690 = vmatprep.subr.bf16.mxu0 0
    %691 = vmatpush2.bf16.msra.mxu0 0
    %692 = vmatprep.subr.bf16.mxu0 0
    %693 = vmatpush2.bf16.msra.mxu0 0
    %694 = vmatprep.subr.bf16.mxu0 0
    %695 = vmatpush2.bf16.msra.mxu0 0
    %696 = vmatprep.subr.bf16.mxu0 0
    %697 = vmatpush2.bf16.msra.mxu0 0
    %698 = vmatprep.subr.bf16.mxu0 0
    %699 = vmatpush2.bf16.msra.mxu0 0
    %700 = vmatprep.subr.bf16.mxu0 0
    %701 = vmatpush2.bf16.msra.mxu0 0
    %702 = vmatprep.subr.bf16.mxu0 0
    %703 = vmatpush2.bf16.msra.mxu0 0
    %704 = vmatprep.subr.bf16.mxu0 0
    %705 = vmatpush2.bf16.msra.mxu0 0
    %706 = vmatprep.mubr.bf16.mxu0 0
    %707 = vmatmul.mubr.bf16.gmra.mxu0 %v673
    %v708 = vpop.f32.mrf.mxu0
    %v709 = vadd.f32 0.0, %v708
    %v710 = vpop.f32.mrf.mxu0
    %v711 = vpop.f32.mrf.mxu0
    %v712 = vpop.f32.mrf.mxu0
    %713 = vdwg.mxu0
    %v714 = vadd.f32 %v672, %v709
    %v715 = vtanh.pop %v714
    %716 = vst [vmem:[#allocation2 + $0x9] sm:$0x1] %v715
    %v717 = vld [vmem:[#allocation3 + $0xa] sm:$0x1]
    %v718 = vpack.c.bf16 %v715, %v715
    %719 = vmatprep.subr.bf16.mxu0 0
    %720 = vmatpush1.bf16.msra.mxu0 %v210
    %721 = vmatprep.subr.bf16.mxu0 0
    %722 = vmatpush1.bf16.msra.mxu0 %v209
    %723 = vmatprep.subr.bf16.mxu0 0
    %724 = vmatpush1.bf16.msra.mxu0 %v208
    %725 = vmatprep.subr.bf16.mxu0 0
    %726 = vmatpush1.bf16.msra.mxu0 %v207
    %727 = vmatprep.subr.bf16.mxu0 0
    %728 = vmatpush1.bf16.msra.mxu0 %v206
    %729 = vmatprep.subr.bf16.mxu0 0
    %730 = vmatpush1.bf16.msra.mxu0 %v205
    %731 = vmatprep.subr.bf16.mxu0 0
    %732 = vmatpush1.bf16.msra.mxu0 %v204
    %733 = vmatprep.subr.bf16.mxu0 0
    %734 = vmatpush1.bf16.msra.mxu0 %v203
    %735 = vmatprep.subr.bf16.mxu0 0
    %736 = vmatpush2.bf16.msra.mxu0 0
    %737 = vmatprep.subr.bf16.mxu0 0
    %738 = vmatpush2.bf16.msra.mxu0 0
    %739 = vmatprep.subr.bf16.mxu0 0
    %740 = vmatpush2.bf16.msra.mxu0 0
    %741 = vmatprep.subr.bf16.mxu0 0
    %742 = vmatpush2.bf16.msra.mxu0 0
    %743 = vmatprep.subr.bf16.mxu0 0
    %744 = vmatpush2.bf16.msra.mxu0 0
    %745 = vmatprep.subr.bf16.mxu0 0
    %746 = vmatpush2.bf16.msra.mxu0 0
    %747 = vmatprep.subr.bf16.mxu0 0
    %748 = vmatpush2.bf16.msra.mxu0 0
    %749 = vmatprep.subr.bf16.mxu0 0
    %750 = vmatpush2.bf16.msra.mxu0 0
    %751 = vmatprep.mubr.bf16.mxu0 0
    %752 = vmatmul.mubr.bf16.gmra.mxu0 %v718
    %v753 = vpop.f32.mrf.mxu0
    %v754 = vadd.f32 0.0, %v753
    %v755 = vpop.f32.mrf.mxu0
    %v756 = vpop.f32.mrf.mxu0
    %v757 = vpop.f32.mrf.mxu0
    %758 = vdwg.mxu0
    %v759 = vadd.f32 %v717, %v754
    %v760 = vtanh.pop %v759
    %761 = vst [vmem:[#allocation2 + $0xa] sm:$0x1] %v760
    %v762 = vld [vmem:[#allocation3 + $0xb] sm:$0x1]
    %v763 = vpack.c.bf16 %v760, %v760
    %764 = vmatprep.subr.bf16.mxu0 0
    %765 = vmatpush1.bf16.msra.mxu0 %v210
    %766 = vmatprep.subr.bf16.mxu0 0
    %767 = vmatpush1.bf16.msra.mxu0 %v209
    %768 = vmatprep.subr.bf16.mxu0 0
    %769 = vmatpush1.bf16.msra.mxu0 %v208
    %770 = vmatprep.subr.bf16.mxu0 0
    %771 = vmatpush1.bf16.msra.mxu0 %v207
    %772 = vmatprep.subr.bf16.mxu0 0
    %773 = vmatpush1.bf16.msra.mxu0 %v206
    %774 = vmatprep.subr.bf16.mxu0 0
    %775 = vmatpush1.bf16.msra.mxu0 %v205
    %776 = vmatprep.subr.bf16.mxu0 0
    %777 = vmatpush1.bf16.msra.mxu0 %v204
    %778 = vmatprep.subr.bf16.mxu0 0
    %779 = vmatpush1.bf16.msra.mxu0 %v203
    %780 = vmatprep.subr.bf16.mxu0 0
    %781 = vmatpush2.bf16.msra.mxu0 0
    %782 = vmatprep.subr.bf16.mxu0 0
    %783 = vmatpush2.bf16.msra.mxu0 0
    %784 = vmatprep.subr.bf16.mxu0 0
    %785 = vmatpush2.bf16.msra.mxu0 0
    %786 = vmatprep.subr.bf16.mxu0 0
    %787 = vmatpush2.bf16.msra.mxu0 0
    %788 = vmatprep.subr.bf16.mxu0 0
    %789 = vmatpush2.bf16.msra.mxu0 0
    %790 = vmatprep.subr.bf16.mxu0 0
    %791 = vmatpush2.bf16.msra.mxu0 0
    %792 = vmatprep.subr.bf16.mxu0 0
    %793 = vmatpush2.bf16.msra.mxu0 0
    %794 = vmatprep.subr.bf16.mxu0 0
    %795 = vmatpush2.bf16.msra.mxu0 0
    %796 = vmatprep.mubr.bf16.mxu0 0
    %797 = vmatmul.mubr.bf16.gmra.mxu0 %v763
    %v798 = vpop.f32.mrf.mxu0
    %v799 = vadd.f32 0.0, %v798
    %v800 = vpop.f32.mrf.mxu0
    %v801 = vpop.f32.mrf.mxu0
    %v802 = vpop.f32.mrf.mxu0
    %803 = vdwg.mxu0
    %v804 = vadd.f32 %v762, %v799
    %v805 = vtanh.pop %v804
    %806 = vst [vmem:[#allocation2 + $0xb] sm:$0x1] %v805
    %v807 = vld [vmem:[#allocation2] sm:$0xff]
    %v808 = vld [vmem:[#allocation2 + $0x8] sm:$0xf]
    %v809 = vld [vmem:[#allocation7] sm:$0xff]
    %v810 = vld [vmem:[#allocation7 + $0x8] sm:$0xff]
    %v811 = vld [vmem:[#allocation7 + $0x10] sm:$0xff]
    %v812 = vld [vmem:[#allocation7 + $0x18] sm:$0xff]
    %v813 = vld [vmem:[#allocation7 + $0x20] sm:$0xff]
    %v814 = vld [vmem:[#allocation7 + $0x28] sm:$0xff]
    %v815 = vld [vmem:[#allocation7 + $0x30] sm:$0xff]
    %v816 = vld [vmem:[#allocation7 + $0x38] sm:$0xff]
    %v817 = vld [vmem:[#allocation7 + $0x40] sm:$0xff]
    %v818 = vld [vmem:[#allocation7 + $0x48] sm:$0xff]
    %v819 = vld [vmem:[#allocation7 + $0x50] sm:$0xff]
    %v820 = vld [vmem:[#allocation7 + $0x58] sm:$0xff]
    %v821 = vld [vmem:[#allocation7 + $0x60] sm:$0xff]
    %v822 = vld [vmem:[#allocation7 + $0x68] sm:$0xff]
    %v823 = vld [vmem:[#allocation7 + $0x70] sm:$0xff]
    %v824 = vld [vmem:[#allocation7 + $0x78] sm:$0xff]
    %v825 = vld [vmem:[%s4] sm:$0x1]
    %v827 = vlaneseq
    %v828 = vshrl.u32 %v827, 7
    %v829 = vsub.s32 0, %v828
    %v830 = vrot.slane %v825, %v829
    %832 = vmatprep.subr.mxu0 0.0
    %833 = vmatpush1.msra.mxu0 %v824
    %834 = vmatprep.subr.mxu0 0.0
    %835 = vmatpush1.msra.mxu0 %v823
    %836 = vmatprep.subr.mxu0 0.0
    %837 = vmatpush1.msra.mxu0 %v822
    %838 = vmatprep.subr.mxu0 0.0
    %839 = vmatpush1.msra.mxu0 %v821
    %840 = vmatprep.subr.mxu0 0.0
    %841 = vmatpush1.msra.mxu0 %v820
    %842 = vmatprep.subr.mxu0 0.0
    %843 = vmatpush1.msra.mxu0 %v819
    %844 = vmatprep.subr.mxu0 0.0
    %845 = vmatpush1.msra.mxu0 %v818
    %846 = vmatprep.subr.mxu0 0.0
    %847 = vmatpush1.msra.mxu0 %v817
    %848 = vmatprep.subr.mxu0 0.0
    %849 = vmatpush1.msra.mxu0 %v816
    %850 = vmatprep.subr.mxu0 0.0
    %851 = vmatpush1.msra.mxu0 %v815
    %852 = vmatprep.subr.mxu0 0.0
    %853 = vmatpush1.msra.mxu0 %v814
    %854 = vmatprep.subr.mxu0 0.0
    %855 = vmatpush1.msra.mxu0 %v813
    %856 = vmatprep.subr.mxu0 0.0
    %857 = vmatpush1.msra.mxu0 %v812
    %858 = vmatprep.subr.mxu0 0.0
    %859 = vmatpush1.msra.mxu0 %v811
    %860 = vmatprep.subr.mxu0 0.0
    %861 = vmatpush1.msra.mxu0 %v810
    %862 = vmatprep.subr.mxu0 0.0
    %863 = vmatpush1.msra.mxu0 %v809
    %864 = vmatprep.subr.mxu0 0.0
    %865 = vmatpush2.msra.mxu0 0.0
    %866 = vmatprep.subr.mxu0 0.0
    %867 = vmatpush2.msra.mxu0 0.0
    %868 = vmatprep.subr.mxu0 0.0
    %869 = vmatpush2.msra.mxu0 0.0
    %870 = vmatprep.subr.mxu0 0.0
    %871 = vmatpush2.msra.mxu0 0.0
    %872 = vmatprep.subr.mxu0 0.0
    %873 = vmatpush2.msra.mxu0 0.0
    %874 = vmatprep.subr.mxu0 0.0
    %875 = vmatpush2.msra.mxu0 0.0
    %876 = vmatprep.subr.mxu0 0.0
    %877 = vmatpush2.msra.mxu0 0.0
    %878 = vmatprep.subr.mxu0 0.0
    %879 = vmatpush2.msra.mxu0 0.0
    %880 = vmatprep.subr.mxu0 0.0
    %881 = vmatpush2.msra.mxu0 0.0
    %882 = vmatprep.subr.mxu0 0.0
    %883 = vmatpush2.msra.mxu0 0.0
    %884 = vmatprep.subr.mxu0 0.0
    %885 = vmatpush2.msra.mxu0 0.0
    %886 = vmatprep.subr.mxu0 0.0
    %887 = vmatpush2.msra.mxu0 0.0
    %888 = vmatprep.subr.mxu0 0.0
    %889 = vmatpush2.msra.mxu0 0.0
    %890 = vmatprep.subr.mxu0 0.0
    %891 = vmatpush2.msra.mxu0 0.0
    %892 = vmatprep.subr.mxu0 0.0
    %893 = vmatpush2.msra.mxu0 0.0
    %894 = vmatprep.subr.mxu0 0.0
    %895 = vmatpush2.msra.mxu0 0.0
    %896 = vmatprep.mubr.f32.mxu0 0.0
    %897 = vmatmul.mubr.f32.gmra.mxu0 %v807
    %v898 = vpop.f32.mrf.mxu0
    %v899 = vadd.f32 %v830, %v898
    %v900 = vpop.f32.mrf.mxu0
    %901 = vmatprep.mubr.f32.mxu0 0.0
    %902 = vmatmul.mubr.f32.gmra.mxu0 %v808
    %v903 = vpop.f32.mrf.mxu0
    %v904 = vadd.f32 %v830, %v903
    %v905 = vpop.f32.mrf.mxu0
    %906 = vdwg.mxu0
    %907 = vst [vmem:[#allocation10] sm:$0xff] %v899
    %908 = vst [vmem:[#allocation10 + $0x8] sm:$0xf] %v904
    // Predicated region
    $region42: #{tpu_custom_call.1} parent=1 // pred_check
      _
    $region43: #{tpu_custom_call.1} parent=1 // pred_check_branch
      %910 = sbr.rel (0) target = $region45
    $region44: #{tpu_custom_call.1} parent=1 // pred_region
      %s912 = ssub.s32 256, 256
      %913 = vsyncadd [#allocation6], %s912
      %s914 = sshll.u32 [#allocation10], 4
      %s915 = int_to_ptr.vmem [resolvable:$true] %s914
      %920 = dma.vmem_to_hbm [thread:$0]  %s915, 256, %s7, [#allocation6], 128, 128, 8
    $region45: #{tpu_custom_call.1} parent=1 // pred_fallthru
      _
    // Predicated region
    $region46: #{tpu_custom_call.1} parent=1 // pred_check
      _
    $region47: #{tpu_custom_call.1} parent=1 // pred_check_branch
      %922 = sbr.rel (0) target = $region49
    $region48: #{tpu_custom_call.1} parent=1 // pred_region
      %923 = dma.done [#allocation6], 256
    $region49: #{tpu_custom_call.1} parent=1 // pred_fallthru
      _
    %924 = vsyncpa [#allocation5], 1
    %925 = vsyncpa [#allocation8], 1
    %926 = vsyncpa [#allocation6], 1

</llo_original>
